<compile_context>
chip_gen: v7x
topology: tpu7x:2x2x1
jax: 0.10.0
libtpu: 0.0.40
codegen_flags: <defaults>
</compile_context>

<pallas_src>
import jax
import jax.numpy as jnp
from jax import lax
from jax.experimental import pallas as pl
from jax.experimental.pallas import tpu as pltpu

ALPHA = 0.25
GAMMA = 2.0

LANE = 128
MAX_TILE_ROWS = 2048      # (2048, 128) f32 = 1 MiB per input block.
NUM_CORE_SPLITS = 2       # leading "parallel" grid axis -> both TCs on v7x;
                          # on 1-TC chips it simply runs sequentially.


def _round_up(x, m):
    return ((x + m - 1) // m) * m


def _bce_with_logits(x, t):
    # Numerically stable BCE-with-logits (PyTorch's formulation):
    #   max(x, 0) - x*t + log(1 + exp(-|x|))
    return jnp.maximum(x, 0.0) - x * t + jnp.log1p(jnp.exp(-jnp.abs(x)))


def focal_loss(pred, target, alpha=ALPHA, gamma=GAMMA):
    """Pallas implementation of FocalLoss(alpha, gamma).forward(pred, target)."""
    assert pred.shape == target.shape
    n = pred.size  # static Python int (shapes are static under jit)

    flat_p = pred.reshape(-1)
    flat_t = target.reshape(-1)
    # Only pad up to the next full lane (<=127 elements) so the data can be viewed
    # as a (rows, 128) slab.  No padding copy happens when n % 128 == 0 (the common
    # NCHW case); any padded elements are masked out inside the kernel.
    rem = n % LANE
    if rem:
        flat_p = jnp.pad(flat_p, (0, LANE - rem))
        flat_t = jnp.pad(flat_t, (0, LANE - rem))

    rows = flat_p.size // LANE
    p2 = flat_p.reshape(rows, LANE)
    t2 = flat_t.reshape(rows, LANE)

    tile_rows = min(MAX_TILE_ROWS, _round_up(rows, 8))
    num_blocks = pl.cdiv(rows, tile_rows)
    blocks_per_split = pl.cdiv(num_blocks, NUM_CORE_SPLITS)

    def in_index_map(i, j):
        # Clamp so a core never requests a block entirely outside the array; the
        # in-kernel mask (computed with the UNclamped index) zeroes its
        # contribution anyway.
        return (jnp.minimum(i * blocks_per_split + j, num_blocks - 1), 0)

    def kernel(p_ref, t_ref, out_ref, acc_ref):
        i = pl.program_id(0)  # core split ("parallel")
        j = pl.program_id(1)  # sequential blocks within the split ("arbitrary")

        @pl.when(j == 0)
        def _():
            acc_ref[...] = jnp.zeros_like(acc_ref)

        x = p_ref[...].astype(jnp.float32)
        t = t_ref[...].astype(jnp.float32)

        # Global flat element index of every element in this logical block, using
        # the UNclamped block index; elements >= n (lane padding, the partial tail
        # block, or a fully out-of-range block of the second split) are masked.
        gb = i * blocks_per_split + j
        row_id = lax.broadcasted_iota(jnp.int32, (tile_rows, LANE), 0)
        col_id = lax.broadcasted_iota(jnp.int32, (tile_rows, LANE), 1)
        flat_idx = (gb * tile_rows + row_id) * LANE + col_id
        mask = flat_idx < n  # int32 indexing; fine for n < 2**31 elements.

        x = jnp.where(mask, x, 0.0)
        t = jnp.where(mask, t, 0.0)
        bce = jnp.where(mask, _bce_with_logits(x, t), 0.0)

        # Vector accumulator: reduce the block to one vreg-shaped (8, 128) partial
        # sum with pure VPU adds (sum over the major axis only).
        acc_ref[...] += bce.reshape(tile_rows // 8, 8, LANE).sum(axis=0)

        @pl.when(j == pl.num_programs(1) - 1)
        def _():
            out_ref[0] = acc_ref[...]

    cost = pl.CostEstimate(
        flops=6 * n,
        transcendentals=2 * n,
        bytes_accessed=(p2.size * p2.dtype.itemsize
                        + t2.size * t2.dtype.itemsize
                        + NUM_CORE_SPLITS * 8 * LANE * 4),
    )

    partial_sums = pl.pallas_call(
        kernel,
        out_shape=jax.ShapeDtypeStruct((NUM_CORE_SPLITS, 8, LANE), jnp.float32),
        grid=(NUM_CORE_SPLITS, blocks_per_split),
        in_specs=[
            pl.BlockSpec((tile_rows, LANE), in_index_map),
            pl.BlockSpec((tile_rows, LANE), in_index_map),
        ],
        out_specs=pl.BlockSpec((1, 8, LANE), lambda i, j: (i, 0, 0)),
        scratch_shapes=[pltpu.VMEM((8, LANE), jnp.float32)],
        compiler_params=pltpu.CompilerParams(
            dimension_semantics=("parallel", "arbitrary"),
        ),
        cost_estimate=cost,
    )(p2, t2)

    # Scalar epilogue (a handful of XLA ops): combine the per-core partial sums,
    # take the mean, and apply the focal modulation to the *mean* BCE — identical
    # to nn.BCEWithLogitsLoss() (mean) followed by alpha*(1-exp(-bce))**gamma*bce.
    bce_mean = jnp.sum(partial_sums) / jnp.float32(n)
    pt = jnp.exp(-bce_mean)
    one_minus_pt = 1.0 - pt
    if gamma == 2.0:
        mod = one_minus_pt * one_minus_pt  # avoid a pow transcendental
    else:
        mod = one_minus_pt ** jnp.float32(gamma)
    return jnp.float32(alpha) * mod * bce_mean


def _reference_focal_loss(pred, target, alpha=ALPHA, gamma=GAMMA):
    x = pred.astype(jnp.float32)
    t = target.astype(jnp.float32)
    bce_mean = jnp.mean(_bce_with_logits(x, t))
    pt = jnp.exp(-bce_mean)
    return alpha * (1.0 - pt) ** gamma * bce_mean


if __name__ == "__main__":
    key = jax.random.PRNGKey(0)
    k1, k2 = jax.random.split(key)
    # Small NCHW-like shapes consistent with a segmentation/detection logit map.
    pred = jax.random.normal(k1, (2, 4, 16, 16), dtype=jnp.float32)
    target = (jax.random.uniform(k2, (2, 4, 16, 16)) > 0.5).astype(jnp.float32)

    loss = focal_loss(pred, target)
    jax.block_until_ready(loss)

    ref = _reference_focal_loss(pred, target)
    assert jnp.allclose(loss, ref, rtol=1e-5, atol=1e-6), (loss, ref)

    print("KERNEL_OK")
</pallas_src>

<mosaic_0001>
module attributes {stable_mosaic.version = 11 : i64} {
  func.func @kernel(%arg0: i32, %arg1: i32, %arg2: memref<16x128xf32, #tpu.memory_space<vmem>>, %arg3: memref<16x128xf32, #tpu.memory_space<vmem>>, %arg4: memref<1x8x128xf32, #tpu.memory_space<vmem>>, %arg5: memref<8x128xf32, #tpu.memory_space<vmem>>) attributes {dimension_semantics = [#tpu.dimension_semantics<parallel>, #tpu.dimension_semantics<arbitrary>], iteration_bounds = array<i64: 2, 1>, scalar_prefetch = 0 : i64, scratch_operands = 1 : i64, tpu.core_type = #tpu.core_type<tc>, window_params = [{transform_indices = @transform_0, window_bounds = array<i64: 16, 128>}, {transform_indices = @transform_1, window_bounds = array<i64: 16, 128>}, {transform_indices = @transform_2, window_bounds = array<i64: 1, 8, 128>}]} {
    %c0_i32 = arith.constant 0 : i32
    %0 = arith.cmpi eq, %arg1, %c0_i32 : i32
    %1 = arith.extui %0 : i1 to i32
    %c0_i32_0 = arith.constant 0 : i32
    %2 = arith.cmpi ne, %1, %c0_i32_0 : i32
    scf.if %2 {
      %cst_15 = arith.constant 0.000000e+00 : f32
      %41 = vector.broadcast %cst_15 : f32 to vector<8x128xf32>
      %c0_16 = arith.constant 0 : index
      %c0_17 = arith.constant 0 : index
      %42 = vector.load %arg5[%c0_16, %c0_17] : memref<8x128xf32, #tpu.memory_space<vmem>>, vector<8x128xf32>
      tpu.vector_store %arg5[%c0_16, %c0_17], %41 {strides = array<i32>} : memref<8x128xf32, #tpu.memory_space<vmem>>, vector<8x128xf32>,
    } else {
    }
    %c0 = arith.constant 0 : index
    %c0_1 = arith.constant 0 : index
    %3 = vector.load %arg2[%c0, %c0_1] : memref<16x128xf32, #tpu.memory_space<vmem>>, vector<16x128xf32>
    %c0_2 = arith.constant 0 : index
    %c0_3 = arith.constant 0 : index
    %4 = vector.load %arg3[%c0_2, %c0_3] : memref<16x128xf32, #tpu.memory_space<vmem>>, vector<16x128xf32>
    %c1_i32 = arith.constant 1 : i32
    %5 = arith.muli %arg0, %c1_i32 : i32
    %6 = arith.addi %5, %arg1 : i32
    %7 = tpu.iota {dimensions = array<i32: 0>} : vector<16x128xi32>
    %8 = tpu.iota {dimensions = array<i32: 1>} : vector<16x128xi32>
    %c16_i32 = arith.constant 16 : i32
    %9 = arith.muli %6, %c16_i32 : i32
    %10 = vector.broadcast %9 : i32 to vector<16x128xi32>
    %11 = arith.addi %10, %7 : vector<16x128xi32>
    %c128_i32 = arith.constant 128 : i32
    %12 = vector.broadcast %c128_i32 : i32 to vector<16x128xi32>
    %13 = arith.muli %11, %12 : vector<16x128xi32>
    %14 = arith.addi %13, %8 : vector<16x128xi32>
    %c2048_i32 = arith.constant 2048 : i32
    %15 = vector.broadcast %c2048_i32 : i32 to vector<16x128xi32>
    %16 = arith.cmpi slt, %14, %15 : vector<16x128xi32>
    %cst = arith.constant 0.000000e+00 : f32
    %17 = vector.broadcast %cst : f32 to vector<16x128xf32>
    %18 = arith.select %16, %3, %17 : vector<16x128xi1>, vector<16x128xf32>
    %cst_4 = arith.constant 0.000000e+00 : f32
    %19 = vector.broadcast %cst_4 : f32 to vector<16x128xf32>
    %20 = arith.select %16, %4, %19 : vector<16x128xi1>, vector<16x128xf32>
    %cst_5 = arith.constant 0.000000e+00 : f32
    %21 = vector.broadcast %cst_5 : f32 to vector<16x128xf32>
    %22 = arith.maximumf %18, %21 : vector<16x128xf32>
    %23 = arith.mulf %18, %20 : vector<16x128xf32>
    %24 = arith.subf %22, %23 : vector<16x128xf32>
    %25 = math.absf %18 : vector<16x128xf32>
    %cst_6 = arith.constant 0.000000e+00 : f32
    %26 = vector.broadcast %cst_6 : f32 to vector<16x128xf32>
    %27 = arith.subf %26, %25 : vector<16x128xf32>
    %28 = math.exp %27 : vector<16x128xf32>
    %29 = math.log1p %28 : vector<16x128xf32>
    %30 = arith.addf %24, %29 : vector<16x128xf32>
    %cst_7 = arith.constant 0.000000e+00 : f32
    %31 = vector.broadcast %cst_7 : f32 to vector<16x128xf32>
    %32 = arith.select %16, %30, %31 : vector<16x128xi1>, vector<16x128xf32>
    %c0_8 = arith.constant 0 : index
    %c0_9 = arith.constant 0 : index
    %33 = vector.load %arg5[%c0_8, %c0_9] : memref<8x128xf32, #tpu.memory_space<vmem>>, vector<8x128xf32>
    %34 = vector.shape_cast %32 : vector<16x128xf32> to vector<2x8x128xf32>
    %cst_10 = arith.constant dense<0.000000e+00> : vector<8x128xf32>
    %35 = vector.multi_reduction <add>, %34, %cst_10 [0] : vector<2x8x128xf32> to vector<8x128xf32>
    %36 = arith.addf %33, %35 : vector<8x128xf32>
    %c0_11 = arith.constant 0 : index
    %c0_12 = arith.constant 0 : index
    %37 = vector.load %arg5[%c0_11, %c0_12] : memref<8x128xf32, #tpu.memory_space<vmem>>, vector<8x128xf32>
    tpu.vector_store %arg5[%c0_11, %c0_12], %36 {strides = array<i32>} : memref<8x128xf32, #tpu.memory_space<vmem>>, vector<8x128xf32>,
    %c0_i32_13 = arith.constant 0 : i32
    %38 = arith.cmpi eq, %arg1, %c0_i32_13 : i32
    %39 = arith.extui %38 : i1 to i32
    %c0_i32_14 = arith.constant 0 : i32
    %40 = arith.cmpi ne, %39, %c0_i32_14 : i32
    scf.if %40 {
      %c0_15 = arith.constant 0 : index
      %c0_16 = arith.constant 0 : index
      %41 = vector.load %arg5[%c0_15, %c0_16] : memref<8x128xf32, #tpu.memory_space<vmem>>, vector<8x128xf32>
      %c0_17 = arith.constant 0 : index
      %c0_18 = arith.constant 0 : index
      %c0_19 = arith.constant 0 : index
      %42 = vector.load %arg4[%c0_17, %c0_18, %c0_19] : memref<1x8x128xf32, #tpu.memory_space<vmem>>, vector<1x8x128xf32>
      %43 = vector.shape_cast %42 : vector<1x8x128xf32> to vector<8x128xf32>
      %44 = vector.shape_cast %41 : vector<8x128xf32> to vector<1x8x128xf32>
      tpu.vector_store %arg4[%c0_17, %c0_18, %c0_19], %44 {strides = array<i32>} : memref<1x8x128xf32, #tpu.memory_space<vmem>>, vector<1x8x128xf32>,
    } else {
    }
    return
  }
  func.func @transform_0(%arg0: i32, %arg1: i32) -> (i32, i32) {
    %c1_i32 = arith.constant 1 : i32
    %0 = arith.muli %arg0, %c1_i32 : i32
    %1 = arith.addi %0, %arg1 : i32
    %c0_i32 = arith.constant 0 : i32
    %2 = arith.minsi %1, %c0_i32 : i32
    %c0_i32_0 = arith.constant 0 : i32
    %c0_i32_1 = arith.constant 0 : i32
    return %2, %c0_i32_0 : i32, i32
  }
  func.func @transform_1(%arg0: i32, %arg1: i32) -> (i32, i32) {
    %c1_i32 = arith.constant 1 : i32
    %0 = arith.muli %arg0, %c1_i32 : i32
    %1 = arith.addi %0, %arg1 : i32
    %c0_i32 = arith.constant 0 : i32
    %2 = arith.minsi %1, %c0_i32 : i32
    %c0_i32_0 = arith.constant 0 : i32
    %c0_i32_1 = arith.constant 0 : i32
    return %2, %c0_i32_0 : i32, i32
  }
  func.func @transform_2(%arg0: i32, %arg1: i32) -> (i32, i32, i32) {
    %c0_i32 = arith.constant 0 : i32
    %c0_i32_0 = arith.constant 0 : i32
    %c0_i32_1 = arith.constant 0 : i32
    return %arg0, %c0_i32, %c0_i32_0 : i32, i32, i32
  }
}

</mosaic_0001>

<llo_original>
// kernel: tpu_custom_call.1
$region0: #{tpu_custom_call.1}
  #allocation0 [shape = 'u32[]', space=smem, size = 0x4, offset = 0x4, fixed_abs, tag = 'smem constant byte address 0x4 - core index']
  #allocation1 [shape = 'u32[144,128]{1,0:T(1,128)}', space=vmem, size = 0x12000, scoped, tag = 'internal scratch']
  #allocation2 [shape = 'f32[8,128]{1,0:T(8,128)}', space=vmem, size = 0x1000, scoped, tag = 'scratch operand']
  %s0 = inlined_call_operand.hbm [shape: f32[16,128], index: 0, kind: input, shape index: {}]
  %s1 = inlined_call_operand.hbm [shape: f32[16,128], index: 1, kind: input, shape index: {}]
  %s2 = inlined_call_operand.hbm [shape: f32[2,8,128], index: 2, kind: output, shape index: {}]
  %s3 = sld [smem:[#allocation0]]
  $region57: #{tpu_custom_call.1} parent=0
    _
  %s5 = ssub.s32 1, %s3
  %s6 = scalar_select 0, %s5, %s3
  $region1: #{tpu_custom_call.1} parent=0
    #allocation3 [shape = 'u8[16384]{0}', space=vmem, size = 0x4000, scoped, tag = 'input window, operand 0']
    #allocation4 [shape = 's32[2]{0}', space=sflag, size = 0x8, scoped, tag = 'scoped memory for tpu_custom_call.1']
    #allocation5 [shape = 's32[2]{0}', space=sflag, size = 0x8, scoped, tag = 'scoped memory for tpu_custom_call.1']
    #allocation6 [shape = 'u8[16384]{0}', space=vmem, size = 0x4000, scoped, tag = 'input window, operand 1']
    #allocation7 [shape = 's32[2]{0}', space=sflag, size = 0x8, scoped, tag = 'scoped memory for tpu_custom_call.1']
    #allocation8 [shape = 'u8[8192]{0}', space=vmem, size = 0x2000, scoped, tag = 'output window, operand 0']
    %7 = vsyncpa [#allocation4], 0
    %s8 = scalar_lea.sflag [#allocation4], 1
    %9 = vsyncpa %s8, 0
    %10 = vsyncpa [#allocation7], 0
    %s11 = scalar_lea.sflag [#allocation7], 1
    %12 = vsyncpa %s11, 0
    %13 = vsyncpa [#allocation5], 0
    %s14 = scalar_lea.sflag [#allocation5], 1
    %15 = vsyncpa %s14, 0
    loop: start=0, step=1, limit=4
    $region2: #{tpu_custom_call.1} parent=1 // loop_pre_header
      _
    $region3: #{tpu_custom_call.1} parent=1 // loop_header
      %s17 = sphi 0, %s21
      %p18 = scmp.ge.s32.totalorder %s17, 4
      %s24 = sphi 0, %s36
      %s25 = sphi 0, %s32
      %s26 = sphi 0, %s24
      %s27 = sphi 0, %s25
      %s28 = sphi 0, %s26
      %s29 = sphi 0, %s27
      %s45 = sphi 0, %s47
      %s48 = sphi 0, %s45
      %s49 = sphi 0, %s48
      %s65 = sphi 0, %s49
      %s77 = sphi 0, %s79
      %s80 = sphi 0, %s77
      %s81 = sphi 0, %s80
      %s97 = sphi 0, %s81
      %s103 = sphi 0, %s105
      %s106 = sphi 0, %s103
      %s107 = sphi 0, %s106
      %s123 = sphi 0, %s107
    $region4: #{tpu_custom_call.1} parent=1 // loop_header_branch
      %20 = sbr.rel (%p18) target = $region8
    $region5: #{tpu_custom_call.1} parent=1 // loop_body
      %s22 = ssub.s32 %s17, 1
      %s23 = ssub.s32 %s17, 2
      %s30 = sadd.s32 1, %s25
      %p31 = scmp.ge.s32.totalorder %s30, 1
      %s32 = scalar_select %p31, 0, %s30
      %s33 = sadd.s32 1, %s24
      %s34 = scalar_select %p31, %s33, %s24
      %p35 = scmp.ge.s32.totalorder %s34, 2
      %s36 = scalar_select %p35, 0, %s34
      %s37 = sadd.s32 %s24, %s25
      %p38 = scmp.lt.s32.totalorder %s37, 0
      %s39 = scalar_select %p38, %s37, 0
      %s40 = sadd.s32 %s36, %s32
      %p41 = scmp.lt.s32.totalorder %s40, 0
      %s42 = scalar_select %p41, %s40, 0
      %s43 = ssub.s32 %s39, %s42
      %p44 = scmp.eq.s32.totalorder %s43, 0
      %s46 = sadd.s32 %s45, 1
      %s47 = scalar_select %p44, %s45, %s46
      %p50 = pneg %p44
      %p51 = scmp.eq.s32.totalorder %s17, 1
      %p52 = por %p50, %p51
      %p53 = scmp.ne.s32.totalorder %s45, %s48
      %p54 = scmp.eq.s32.totalorder %s17, 0
      %p55 = por %p53, %p54
      %p56 = scmp.ne.s32.totalorder %s45, %s48
      %p57 = scmp.eq.s32.totalorder %s22, 1
      %p58 = por %p56, %p57
      %p59 = scmp.ne.s32.totalorder %s48, %s49
      %p60 = scmp.eq.s32.totalorder %s22, 0
      %p61 = por %p59, %p60
      %p62 = scmp.ne.s32.totalorder %s48, %s49
      %p63 = scmp.eq.s32.totalorder %s23, 1
      %p64 = por %p62, %p63
      %p66 = scmp.ne.s32.totalorder %s49, %s65
      %p67 = scmp.eq.s32.totalorder %s23, 0
      %p68 = por %p66, %p67
      %s69 = sadd.s32 %s24, %s25
      %p70 = scmp.lt.s32.totalorder %s69, 0
      %s71 = scalar_select %p70, %s69, 0
      %s72 = sadd.s32 %s36, %s32
      %p73 = scmp.lt.s32.totalorder %s72, 0
      %s74 = scalar_select %p73, %s72, 0
      %s75 = ssub.s32 %s71, %s74
      %p76 = scmp.eq.s32.totalorder %s75, 0
      %s78 = sadd.s32 %s77, 1
      %s79 = scalar_select %p76, %s77, %s78
      %p82 = pneg %p76
      %p83 = scmp.eq.s32.totalorder %s17, 1
      %p84 = por %p82, %p83
      %p85 = scmp.ne.s32.totalorder %s77, %s80
      %p86 = scmp.eq.s32.totalorder %s17, 0
      %p87 = por %p85, %p86
      %p88 = scmp.ne.s32.totalorder %s77, %s80
      %p89 = scmp.eq.s32.totalorder %s22, 1
      %p90 = por %p88, %p89
      %p91 = scmp.ne.s32.totalorder %s80, %s81
      %p92 = scmp.eq.s32.totalorder %s22, 0
      %p93 = por %p91, %p92
      %p94 = scmp.ne.s32.totalorder %s80, %s81
      %p95 = scmp.eq.s32.totalorder %s23, 1
      %p96 = por %p94, %p95
      %p98 = scmp.ne.s32.totalorder %s81, %s97
      %p99 = scmp.eq.s32.totalorder %s23, 0
      %p100 = por %p98, %p99
      %s101 = ssub.s32 %s24, %s36
      %p102 = scmp.eq.s32.totalorder %s101, 0
      %s104 = sadd.s32 %s103, 1
      %s105 = scalar_select %p102, %s103, %s104
      %p108 = pneg %p102
      %p109 = scmp.eq.s32.totalorder %s17, 1
      %p110 = por %p108, %p109
      %p111 = scmp.ne.s32.totalorder %s103, %s106
      %p112 = scmp.eq.s32.totalorder %s17, 0
      %p113 = por %p111, %p112
      %p114 = scmp.ne.s32.totalorder %s103, %s106
      %p115 = scmp.eq.s32.totalorder %s22, 1
      %p116 = por %p114, %p115
      %p117 = scmp.ne.s32.totalorder %s106, %s107
      %p118 = scmp.eq.s32.totalorder %s22, 0
      %p119 = por %p117, %p118
      %p120 = scmp.ne.s32.totalorder %s106, %s107
      %p121 = scmp.eq.s32.totalorder %s23, 1
      %p122 = por %p120, %p121
      %p124 = scmp.ne.s32.totalorder %s107, %s123
      %p125 = scmp.eq.s32.totalorder %s23, 0
      %p126 = por %p124, %p125
      %p127 = scmp.le.s32.totalorder 1, %s17
      %p128 = scmp.lt.s32.totalorder %s17, 3
      %p129 = pnand %p127, %p128
      %p130 = pneg %p129
      // Predicated region
      $region9: #{tpu_custom_call.1} parent=5 // pred_check
        _
      $region10: #{tpu_custom_call.1} parent=5 // pred_check_branch
        %132 = sbr.rel (%p129) target = $region12
      $region11: #{tpu_custom_call.1} parent=5 // pred_region
        %s133 = ssub.s32 %s17, 1
      $region12: #{tpu_custom_call.1} parent=5 // pred_fallthru
        _
      %p134 = scmp.lt.s32.totalorder %s17, 2
      // Predicated region
      $region13: #{tpu_custom_call.1} parent=5 // pred_check
        %p135 = pneg %p134
      $region14: #{tpu_custom_call.1} parent=5 // pred_check_branch
        %137 = sbr.rel (%p135) target = $region16
      $region15: #{tpu_custom_call.1} parent=5 // pred_region
        // Predicated region
        $region17: #{tpu_custom_call.1} parent=15 // pred_check
          %p138 = pneg %p55
        $region18: #{tpu_custom_call.1} parent=15 // pred_check_branch
          %140 = sbr.rel (%p138) target = $region20
        $region19: #{tpu_custom_call.1} parent=15 // pred_region
          %s141 = sand.u32 %s45, 1
          %s142 = scalar_lea.sflag [#allocation4], %s141
          %s143 = sand.u32 %s45, 1
          %s144 = smul.addr %s143, 16
          %s145 = scalar_lea.vmem [#allocation3], %s144
          %s146 = sadd.s32 %s24, %s25
          %p147 = scmp.lt.s32.totalorder %s146, 0
          %s148 = scalar_select %p147, %s146, 0
          %s149 = smul.u32 2, %s148
          %s151 = ssub.s32 256, 256
          %152 = vsyncadd %s142, %s151
          %s153 = smul.addr %s149, 128
          %s154 = scalar_lea.hbm %s0, %s153
          %s155 = sshll.u32 %s145, 4
          %s156 = int_to_ptr.vmem [resolvable:$true] %s155
          %161 = dma.hbm_to_vmem [thread:$0]  %s154, 256, %s156, %s142, 128, 128, 8
        $region20: #{tpu_custom_call.1} parent=15 // pred_fallthru
          _
        // Predicated region
        $region21: #{tpu_custom_call.1} parent=15 // pred_check
          %p162 = pneg %p87
        $region22: #{tpu_custom_call.1} parent=15 // pred_check_branch
          %164 = sbr.rel (%p162) target = $region24
        $region23: #{tpu_custom_call.1} parent=15 // pred_region
          %s165 = sand.u32 %s77, 1
          %s166 = scalar_lea.sflag [#allocation7], %s165
          %s167 = sand.u32 %s77, 1
          %s168 = smul.addr %s167, 16
          %s169 = scalar_lea.vmem [#allocation6], %s168
          %s170 = sadd.s32 %s24, %s25
          %p171 = scmp.lt.s32.totalorder %s170, 0
          %s172 = scalar_select %p171, %s170, 0
          %s173 = smul.u32 2, %s172
          %s175 = ssub.s32 256, 256
          %176 = vsyncadd %s166, %s175
          %s177 = smul.addr %s173, 128
          %s178 = scalar_lea.hbm %s1, %s177
          %s179 = sshll.u32 %s169, 4
          %s180 = int_to_ptr.vmem [resolvable:$true] %s179
          %185 = dma.hbm_to_vmem [thread:$0]  %s178, 256, %s180, %s166, 128, 128, 8
        $region24: #{tpu_custom_call.1} parent=15 // pred_fallthru
          _
      $region16: #{tpu_custom_call.1} parent=5 // pred_fallthru
        _
      %p186 = scmp.le.s32.totalorder 1, %s17
      %p187 = scmp.lt.s32.totalorder %s17, 3
      %p188 = pnand %p186, %p187
      %p189 = pneg %p188
      // Predicated region
      $region25: #{tpu_custom_call.1} parent=5 // pred_check
        _
      $region26: #{tpu_custom_call.1} parent=5 // pred_check_branch
        %191 = sbr.rel (%p188) target = $region28
      $region27: #{tpu_custom_call.1} parent=5 // pred_region
        %s192 = ssub.s32 %s17, 1
        %s193 = sand.u32 %s48, 1
        %s194 = scalar_lea.sflag [#allocation4], %s193
        %s195 = sand.u32 %s48, 1
        %s196 = smul.addr %s195, 16
        %s197 = scalar_lea.vmem [#allocation3], %s196
        // Predicated region
        $region29: #{tpu_custom_call.1} parent=27 // pred_check
          %p198 = pneg %p61
        $region30: #{tpu_custom_call.1} parent=27 // pred_check_branch
          %200 = sbr.rel (%p198) target = $region32
        $region31: #{tpu_custom_call.1} parent=27 // pred_region
          %201 = dma.done %s194, 256
        $region32: #{tpu_custom_call.1} parent=27 // pred_fallthru
          _
        %s202 = sand.u32 %s80, 1
        %s203 = scalar_lea.sflag [#allocation7], %s202
        %s204 = sand.u32 %s80, 1
        %s205 = smul.addr %s204, 16
        %s206 = scalar_lea.vmem [#allocation6], %s205
        // Predicated region
        $region33: #{tpu_custom_call.1} parent=27 // pred_check
          %p207 = pneg %p93
        $region34: #{tpu_custom_call.1} parent=27 // pred_check_branch
          %209 = sbr.rel (%p207) target = $region36
        $region35: #{tpu_custom_call.1} parent=27 // pred_region
          %210 = dma.done %s203, 256
        $region36: #{tpu_custom_call.1} parent=27 // pred_fallthru
          _
        %s211 = sand.u32 %s48, 1
        %s212 = scalar_lea.sflag [#allocation4], %s211
        %s213 = sand.u32 %s48, 1
        %s214 = smul.addr %s213, 16
        %s215 = scalar_lea.vmem [#allocation3], %s214
        %p216 = pneg %p61
        %p217 = pneg %p58
        %s218 = sand.u32 %s80, 1
        %s219 = scalar_lea.sflag [#allocation7], %s218
        %s220 = sand.u32 %s80, 1
        %s221 = smul.addr %s220, 16
        %s222 = scalar_lea.vmem [#allocation6], %s221
        %p223 = pneg %p93
        %p224 = pneg %p90
        %p225 = pneg %p119
        %p226 = pneg %p116
        %s227 = sand.u32 %s106, 1
        %s228 = scalar_lea.sflag [#allocation5], %s227
        %s229 = sand.u32 %s106, 1
        %s230 = smul.addr %s229, 8
        %s231 = scalar_lea.vmem [#allocation8], %s230
        %s232 = sadd.s32 %s26, %s27
        %p233 = scmp.lt.s32.totalorder %s232, 0
        %s234 = scalar_select %p233, %s232, 0
        %s235 = smul.u32 2, %s234
        %s236 = sadd.s32 %s26, %s27
        %p237 = scmp.lt.s32.totalorder %s236, 0
        %s238 = scalar_select %p237, %s236, 0
        %s239 = smul.u32 2, %s238
        %p240 = scmp.eq.s32.totalorder %s27, 0
        // Predicated region
        $region37: #{tpu_custom_call.1} parent=27 // pred_check
          %p241 = pneg %p240
        $region38: #{tpu_custom_call.1} parent=27 // pred_check_branch
          %243 = sbr.rel (%p241) target = $region40
        $region39: #{tpu_custom_call.1} parent=27 // pred_region
          %244 = vst [vmem:[#allocation2] sm:$0xff] 0.0
        $region40: #{tpu_custom_call.1} parent=27 // pred_fallthru
          _
        %v245 = vld [vmem:[%s197] sm:$0xff]
        %v246 = vld [vmem:[%s197 + $0x8] sm:$0xff]
        %v247 = vld [vmem:[%s206] sm:$0xff]
        %v248 = vld [vmem:[%s206 + $0x8] sm:$0xff]
        %s249 = sadd.s32 %s26, %s27
        %v250 = vlaneseq
        %v251 = vshrl.u32 %v250, 7
        %v252 = vadd.s32 %v251, 8
        %v253 = vlaneseq
        %v254 = vand.u32 %v253, 127
        %s255 = smul.u32 %s249, 16
        %v256 = vstv %s255
        %v257 = vadd.s32 %v256, %v251
        %v258 = vadd.s32 %v256, %v252
        %v259 = vmul.u32 %v257, 128
        %v260 = vmul.u32 %v258, 128
        %v261 = vadd.s32 %v259, %v254
        %v262 = vadd.s32 %v260, %v254
        %vm263 = vcmp.lt.s32.totalorder %v261, 2048
        %vm264 = vcmp.lt.s32.totalorder %v262, 2048
        %v265 = vsel %vm263, %v245, 0.0
        %v266 = vsel %vm264, %v246, 0.0
        %v267 = vsel %vm263, %v247, 0.0
        %v268 = vsel %vm264, %v248, 0.0
        %v269 = vmax.f32 %v265, 0.0
        %v270 = vmax.f32 %v266, 0.0
        %v271 = vmul.f32 %v265, %v267
        %v272 = vmul.f32 %v266, %v268
        %v273 = vsub.f32 %v269, %v271
        %v274 = vsub.f32 %v270, %v272
        %v275 = vand.u32 2147483647, %v265
        %v276 = vand.u32 2147483647, %v266
        %v277 = vsub.f32 0.0, %v275
        %v278 = vsub.f32 0.0, %v276
        %v279 = vmul.f32 %v277, 1.442695
        %v280 = vpow.pop %v279
        %v281 = vmul.f32 %v278, 1.442695
        %v282 = vpow.pop %v281
        %v283 = vadd.f32 %v280, 1.0
        %v284 = vlog2.pop %v283
        %v285 = vmul.f32 %v284, 0.6931472
        %v286 = vmul.f32 -0.5, %v280
        %v287 = vadd.f32 %v286, 1.0
        %v288 = vmul.f32 %v287, %v280
        %v289 = vand.u32 2147483647, %v280
        %vm290 = vcmp.lt.f32.partialorder %v289, 0.0004427343
        %v291 = vsel %vm290, %v288, %v285
        %v292 = vadd.f32 %v282, 1.0
        %v293 = vlog2.pop %v292
        %v294 = vmul.f32 %v293, 0.6931472
        %v295 = vmul.f32 -0.5, %v282
        %v296 = vadd.f32 %v295, 1.0
        %v297 = vmul.f32 %v296, %v282
        %v298 = vand.u32 2147483647, %v282
        %vm299 = vcmp.lt.f32.partialorder %v298, 0.0004427343
        %v300 = vsel %vm299, %v297, %v294
        %v301 = vadd.f32 %v273, %v291
        %v302 = vadd.f32 %v274, %v300
        %v303 = vsel %vm263, %v301, 0.0
        %v304 = vsel %vm264, %v302, 0.0
        %v305 = vld [vmem:[#allocation2] sm:$0xff]
        %v306 = vadd.f32 %v303, %v304
        %v307 = vadd.f32 %v305, %v306
        %308 = vst [vmem:[#allocation2] sm:$0xff] %v307
        // Predicated region
        $region41: #{tpu_custom_call.1} parent=27 // pred_check
          %p309 = pneg %p240
        $region42: #{tpu_custom_call.1} parent=27 // pred_check_branch
          %311 = sbr.rel (%p309) target = $region44
        $region43: #{tpu_custom_call.1} parent=27 // pred_region
          %v312 = vld [vmem:[#allocation2] sm:$0xff]
          %313 = vst [vmem:[%s231] sm:$0xff] %v312
        $region44: #{tpu_custom_call.1} parent=27 // pred_fallthru
          _
        %s314 = sand.u32 %s106, 1
        %s315 = scalar_lea.sflag [#allocation5], %s314
        %s316 = sand.u32 %s106, 1
        %s317 = smul.addr %s316, 8
        %s318 = scalar_lea.vmem [#allocation8], %s317
        // Predicated region
        $region45: #{tpu_custom_call.1} parent=27 // pred_check
          %p319 = pneg %p116
        $region46: #{tpu_custom_call.1} parent=27 // pred_check_branch
          %321 = sbr.rel (%p319) target = $region48
        $region47: #{tpu_custom_call.1} parent=27 // pred_region
          %s323 = ssub.s32 128, 128
          %324 = vsyncadd %s315, %s323
          %s325 = smul.addr %s26, 128
          %s326 = scalar_lea.hbm %s2, %s325
          %s328 = sshll.u32 %s318, 4
          %s329 = int_to_ptr.vmem [resolvable:$true] %s328
          %331 = dma.vmem_to_hbm [thread:$0]  %s329, 128, %s326, %s315
        $region48: #{tpu_custom_call.1} parent=27 // pred_fallthru
          _
      $region28: #{tpu_custom_call.1} parent=5 // pred_fallthru
        _
      %p332 = scmp.le.s32.totalorder 2, %s17
      // Predicated region
      $region49: #{tpu_custom_call.1} parent=5 // pred_check
        %p333 = pneg %p332
      $region50: #{tpu_custom_call.1} parent=5 // pred_check_branch
        %335 = sbr.rel (%p333) target = $region52
      $region51: #{tpu_custom_call.1} parent=5 // pred_region
        %s336 = ssub.s32 %s17, 2
        // Predicated region
        $region53: #{tpu_custom_call.1} parent=51 // pred_check
          %p337 = pneg %p122
        $region54: #{tpu_custom_call.1} parent=51 // pred_check_branch
          %339 = sbr.rel (%p337) target = $region56
        $region55: #{tpu_custom_call.1} parent=51 // pred_region
          %s340 = sand.u32 %s107, 1
          %s341 = scalar_lea.sflag [#allocation5], %s340
          %s342 = sand.u32 %s107, 1
          %s343 = smul.addr %s342, 8
          %s344 = scalar_lea.vmem [#allocation8], %s343
          %345 = dma.done %s341, 128
        $region56: #{tpu_custom_call.1} parent=51 // pred_fallthru
          _
      $region52: #{tpu_custom_call.1} parent=5 // pred_fallthru
        _
    $region6: #{tpu_custom_call.1} parent=1 // loop_footer
      %s21 = sadd.s32 1, %s17
    $region7: #{tpu_custom_call.1} parent=1 // loop_footer_branch
      %16 = sbr.rel target = $region3
    $region8: #{tpu_custom_call.1} parent=1 // loop_exit
      _
    %346 = vsyncpa [#allocation4], 1
    %s347 = scalar_lea.sflag [#allocation4], 1
    %348 = vsyncpa %s347, 1
    %349 = vsyncpa [#allocation7], 1
    %s350 = scalar_lea.sflag [#allocation7], 1
    %351 = vsyncpa %s350, 1
    %352 = vsyncpa [#allocation5], 1
    %s353 = scalar_lea.sflag [#allocation5], 1
    %354 = vsyncpa %s353, 1

</llo_original>
